<compile_context>
chip_gen: v6e
topology: v6e:2x2x1
jax: 0.10.0
libtpu: 0.0.40
codegen_flags: <defaults>
</compile_context>

<pallas_src>
import math
import numpy as np
import jax
import jax.numpy as jnp
from jax import lax
from jax.experimental import pallas as pl
from jax.experimental.pallas import tpu as pltpu


_TAPS = tuple((dy, dx) for dy in range(3) for dx in range(3))   # matches w.reshape(9, Cin, Cout)
_VMEM_LIMIT = 64 * 1024 * 1024    # <= physical VMEM on every generation (v7x: 64 MiB)


# ----------------------------- small helpers -------------------------------

def _row_tile(rows):
    for t in (1024, 512, 256, 128, 64, 32, 16, 8):
        if rows % t == 0:
            return t
    return rows                        # full extent (allowed by BlockSpec rules)


def _col_tile(cout):
    for t in (256, 128):
        if cout % t == 0:
            return t
    return cout


# ------------------------- BN1 + ReLU (lane-dense) --------------------------

def _bn_relu_kernel(x_ref, s_ref, b_ref, o_ref):
    o_ref[...] = jnp.maximum(x_ref[...] * s_ref[...] + b_ref[...], 0.0)


def bn_relu(x_nhwc, scale, bias):
    """Fused inference BatchNorm + ReLU on an NHWC tensor, lane-dense layout."""
    n, h, w, c = x_nhwc.shape
    total = n * h * w * c
    cols = (c * 128) // math.gcd(c, 128)                 # lcm(c, 128)
    if cols <= 4096 and total % cols == 0:
        x2 = x_nhwc.reshape(-1, cols)
        rep = cols // c
        s2 = jnp.tile(scale, rep).reshape(1, cols)       # scale[l % c] at lane l
        b2 = jnp.tile(bias, rep).reshape(1, cols)
    else:                                                # fallback: (rows, C)
        x2 = x_nhwc.reshape(-1, c)
        s2 = scale.reshape(1, c)
        b2 = bias.reshape(1, c)
    rows, width = x2.shape
    tm = _row_tile(rows)
    out = pl.pallas_call(
        _bn_relu_kernel,
        out_shape=jax.ShapeDtypeStruct((rows, width), x2.dtype),
        grid=(rows // tm,),
        in_specs=[pl.BlockSpec((tm, width), lambda i: (i, 0)),
                  pl.BlockSpec((1, width), lambda i: (0, 0)),
                  pl.BlockSpec((1, width), lambda i: (0, 0))],
        out_specs=pl.BlockSpec((tm, width), lambda i: (i, 0)),
        compiler_params=pltpu.CompilerParams(
            dimension_semantics=("parallel",),
            vmem_limit_bytes=_VMEM_LIMIT),
    )(x2, s2, b2)
    return out.reshape(n, h, w, c)


# ------------------- conv glue: pad + space-to-depth ------------------------

def _pad_s2d(a, stride):
    """Zero-pad (pad=1) an NHWC tensor and space-to-depth it by `stride`.

    Returns t with shape (N, s*s, Hp//s, Wp//s, C) such that
        t[n, p*s + q, i, j, c] == padded_a[n, i*s + p, j*s + q, c]
    so a 3x3 tap (dy, dx) at conv stride s becomes the *unstrided* static slice
        t[n, (dy%s)*s + dx%s, dy//s : dy//s+Ho, dx//s : dx//s+Wo, :].
    Data volume ~1x the activation (vs 9x for materialized im2col).
    """
    n, h, w, c = a.shape
    s = stride
    hp = -(-(h + 2) // s) * s
    wp = -(-(w + 2) // s) * s
    ap = jnp.pad(a, ((0, 0), (1, hp - h - 1), (1, wp - w - 1), (0, 0)))
    t = ap.reshape(n, hp // s, s, wp // s, s, c)
    t = jnp.transpose(t, (0, 2, 4, 1, 3, 5))
    return t.reshape(n, s * s, hp // s, wp // s, c)


# ----------------------- fused conv kernels (Pallas) ------------------------

def _accum_taps(x_ref, w_ref, taps, s, ho, wo):
    """sum_t  slice_t(x) @ w[t]  ->  (ho*wo, Cout_tile) float32 accumulator."""
    cin = x_ref.shape[-1]
    acc = jnp.zeros((ho * wo, w_ref.shape[-1]), jnp.float32)
    for t, (dy, dx) in enumerate(taps):
        p = (dy % s) * s + (dx % s)
        oy, ox = dy // s, dx // s
        xt = x_ref[0, p, oy:oy + ho, ox:ox + wo, :]          # (ho, wo, cin), static slice
        xt = xt.reshape(ho * wo, cin)
        acc = acc + jnp.dot(xt, w_ref[t], preferred_element_type=jnp.float32)
    return acc


def _make_conv_bnrelu_kernel(taps, s, ho, wo):
    def kernel(x_ref, w_ref, scale_ref, bias_ref, o_ref):
        acc = _accum_taps(x_ref, w_ref, taps, s, ho, wo)
        o_ref[0] = jnp.maximum(acc * scale_ref[...] + bias_ref[...], 0.0).astype(o_ref.dtype)
    return kernel


def _make_conv_add_identity_kernel(taps, s, ho, wo):
    def kernel(x_ref, w_ref, sc_ref, o_ref):
        acc = _accum_taps(x_ref, w_ref, taps, s, ho, wo)
        o_ref[0] = (acc + sc_ref[0].astype(jnp.float32)).astype(o_ref.dtype)
    return kernel


def _make_conv_add_conv_kernel(taps, s, sc_taps, sc_s, ho, wo):
    def kernel(x_ref, w_ref, xs_ref, ws_ref, o_ref):
        acc = _accum_taps(x_ref, w_ref, taps, s, ho, wo)
        acc = acc + _accum_taps(xs_ref, ws_ref, sc_taps, sc_s, ho, wo)
        o_ref[0] = acc.astype(o_ref.dtype)
    return kernel


def conv3x3_bnrelu(a, w, scale, bias, stride, compute_dtype=jnp.float32):
    """relu(bn2(conv3x3_stride(a))) with folded BN, fused in one Pallas kernel."""
    n, h, wi, cin = a.shape
    cout = w.shape[-1]
    ho = (h - 1) // stride + 1
    wo = (wi - 1) // stride + 1
    xt = _pad_s2d(a, stride).astype(compute_dtype)
    wr = w.reshape(9, cin, cout).astype(compute_dtype)
    tco = _col_tile(cout)
    kernel = _make_conv_bnrelu_kernel(_TAPS, stride, ho, wo)
    out = pl.pallas_call(
        kernel,
        out_shape=jax.ShapeDtypeStruct((n, ho * wo, cout), jnp.float32),
        grid=(n, cout // tco),
        in_specs=[
            pl.BlockSpec((1, stride * stride, xt.shape[2], xt.shape[3], cin),
                         lambda i, j: (i, 0, 0, 0, 0)),
            pl.BlockSpec((9, cin, tco), lambda i, j: (0, 0, j)),
            pl.BlockSpec((1, tco), lambda i, j: (0, j)),
            pl.BlockSpec((1, tco), lambda i, j: (0, j)),
        ],
        out_specs=pl.BlockSpec((1, ho * wo, tco), lambda i, j: (i, 0, j)),
        compiler_params=pltpu.CompilerParams(
            dimension_semantics=("parallel", "parallel"),
            vmem_limit_bytes=_VMEM_LIMIT),
    )(xt, wr, scale.reshape(1, cout), bias.reshape(1, cout))
    return out.reshape(n, ho, wo, cout)


def conv3x3_add_identity(h1, w, sc, compute_dtype=jnp.float32):
    """conv3x3_1(h1) + sc (identity shortcut), fused in one Pallas kernel."""
    n, ho, wo, cout = h1.shape
    xt = _pad_s2d(h1, 1).astype(compute_dtype)
    wr = w.reshape(9, cout, cout).astype(compute_dtype)
    sc2 = sc.reshape(n, ho * wo, cout).astype(jnp.float32)
    tco = _col_tile(cout)
    kernel = _make_conv_add_identity_kernel(_TAPS, 1, ho, wo)
    out = pl.pallas_call(
        kernel,
        out_shape=jax.ShapeDtypeStruct((n, ho * wo, cout), jnp.float32),
        grid=(n, cout // tco),
        in_specs=[
            pl.BlockSpec((1, 1, xt.shape[2], xt.shape[3], cout),
                         lambda i, j: (i, 0, 0, 0, 0)),
            pl.BlockSpec((9, cout, tco), lambda i, j: (0, 0, j)),
            pl.BlockSpec((1, ho * wo, tco), lambda i, j: (i, 0, j)),
        ],
        out_specs=pl.BlockSpec((1, ho * wo, tco), lambda i, j: (i, 0, j)),
        compiler_params=pltpu.CompilerParams(
            dimension_semantics=("parallel", "parallel"),
            vmem_limit_bytes=_VMEM_LIMIT),
    )(xt, wr, sc2)
    return out.reshape(n, ho, wo, cout)


def conv3x3_add_conv1x1(h1, w, a, w_sc, stride, compute_dtype=jnp.float32):
    """conv3x3_1(h1) + conv1x1_stride(a)  (projection shortcut), fused."""
    n, ho, wo, cout = h1.shape
    cin = a.shape[-1]
    xt1 = _pad_s2d(h1, 1).astype(compute_dtype)
    xt2 = _pad_s2d(a, stride).astype(compute_dtype)      # 1x1/stride conv == tap (1,1) of the padded slab
    wr = w.reshape(9, cout, cout).astype(compute_dtype)
    wscr = w_sc.reshape(1, cin, cout).astype(compute_dtype)
    tco = _col_tile(cout)
    kernel = _make_conv_add_conv_kernel(_TAPS, 1, ((1, 1),), stride, ho, wo)
    out = pl.pallas_call(
        kernel,
        out_shape=jax.ShapeDtypeStruct((n, ho * wo, cout), jnp.float32),
        grid=(n, cout // tco),
        in_specs=[
            pl.BlockSpec((1, 1, xt1.shape[2], xt1.shape[3], cout),
                         lambda i, j: (i, 0, 0, 0, 0)),
            pl.BlockSpec((9, cout, tco), lambda i, j: (0, 0, j)),
            pl.BlockSpec((1, stride * stride, xt2.shape[2], xt2.shape[3], cin),
                         lambda i, j: (i, 0, 0, 0, 0)),
            pl.BlockSpec((1, cin, tco), lambda i, j: (0, 0, j)),
        ],
        out_specs=pl.BlockSpec((1, ho * wo, tco), lambda i, j: (i, 0, j)),
        compiler_params=pltpu.CompilerParams(
            dimension_semantics=("parallel", "parallel"),
            vmem_limit_bytes=_VMEM_LIMIT),
    )(xt1, wr, xt2, wscr)
    return out.reshape(n, ho, wo, cout)


# ---------------------------- BasicBlock / NetworkBlock ---------------------

def basic_block_forward(x, p, stride, compute_dtype=jnp.float32):
    """x: (N, H, W, Cin) NHWC float32."""
    n, h, w, cin = x.shape
    cout = p["w1"].shape[-1]
    equal_in_out = (cin == cout)                     # matches PyTorch BasicBlock

    a = bn_relu(x, p["bn1_scale"], p["bn1_bias"])    # relu1(bn1(x))

    # conv1 (3x3, stride, pad 1) fused with bn2 + relu2
    h1 = conv3x3_bnrelu(a, p["w1"], p["bn2_scale"], p["bn2_bias"], stride, compute_dtype)

    # TODO(synk): dropout (drop_rate > 0, training mode) not implemented; drop_rate == 0 / inference.

    # conv2 (3x3, stride 1, pad 1) fused with the residual add
    if equal_in_out:
        y = conv3x3_add_identity(h1, p["w2"], x, compute_dtype)
    else:
        y = conv3x3_add_conv1x1(h1, p["w2"], a, p["w_sc"], stride, compute_dtype)
    return y


def network_block_forward(x_nchw, params, stride, compute_dtype=jnp.float32):
    """Public API: NCHW in, NCHW out (PyTorch convention)."""
    x = jnp.transpose(x_nchw, (0, 2, 3, 1)).astype(jnp.float32)    # NCHW -> NHWC
    for i, p in enumerate(params):
        x = basic_block_forward(x, p, stride if i == 0 else 1, compute_dtype)
    return jnp.transpose(x, (0, 3, 1, 2))                          # NHWC -> NCHW


# --------------------------- parameter construction ------------------------

def init_basic_block_params(key, cin, cout):
    ks = jax.random.split(key, 11)

    def folded_bn(kg, kb, km, kv, c):
        gamma = 1.0 + 0.1 * jax.random.normal(kg, (c,), jnp.float32)
        beta = 0.1 * jax.random.normal(kb, (c,), jnp.float32)
        mean = 0.1 * jax.random.normal(km, (c,), jnp.float32)
        var = 1.0 + 0.2 * jax.random.uniform(kv, (c,), jnp.float32)
        scale = gamma / jnp.sqrt(var + 1e-5)
        return scale, beta - mean * scale

    s1, b1 = folded_bn(ks[0], ks[1], ks[2], ks[3], cin)
    s2, b2 = folded_bn(ks[4], ks[5], ks[6], ks[7], cout)
    w1 = jax.random.normal(ks[8], (3, 3, cin, cout), jnp.float32) * np.sqrt(2.0 / (9 * cout))
    w2 = jax.random.normal(ks[9], (3, 3, cout, cout), jnp.float32) * np.sqrt(2.0 / (9 * cout))
    p = dict(bn1_scale=s1, bn1_bias=b1, bn2_scale=s2, bn2_bias=b2, w1=w1, w2=w2)
    if cin != cout:
        p["w_sc"] = jax.random.normal(ks[10], (1, 1, cin, cout), jnp.float32) * np.sqrt(2.0 / cout)
    return p


# ------------------------------ pure-JAX reference --------------------------

def ref_basic_block(x, p, stride):
    cin, cout = x.shape[-1], p["w1"].shape[-1]
    dn = ("NHWC", "HWIO", "NHWC")
    a = jnp.maximum(x * p["bn1_scale"] + p["bn1_bias"], 0.0)
    h1 = lax.conv_general_dilated(a, p["w1"], (stride, stride), ((1, 1), (1, 1)),
                                  dimension_numbers=dn)
    h1 = jnp.maximum(h1 * p["bn2_scale"] + p["bn2_bias"], 0.0)
    out = lax.conv_general_dilated(h1, p["w2"], (1, 1), ((1, 1), (1, 1)),
                                   dimension_numbers=dn)
    if cin == cout:
        sc = x
    else:
        sc = lax.conv_general_dilated(a, p["w_sc"], (stride, stride), ((0, 0), (0, 0)),
                                      dimension_numbers=dn)
    return out + sc


# ------------------------------------ main ----------------------------------

if __name__ == "__main__":
    nb_layers, in_planes, out_planes, stride = 2, 4, 8, 2

    key = jax.random.PRNGKey(0)
    kx, kp = jax.random.split(key)
    x = jax.random.normal(kx, (2, in_planes, 16, 16), jnp.float32)   # NCHW, like PyTorch

    pkeys = jax.random.split(kp, nb_layers)
    params = []
    for i in range(nb_layers):
        cin = in_planes if i == 0 else out_planes
        params.append(init_basic_block_params(pkeys[i], cin, out_planes))

    # compute_dtype=jnp.bfloat16 halves operand DMA bytes and boosts MXU rate;
    # kept float32 here so the strict cross-check below is guaranteed to pass.
    y = network_block_forward(x, params, stride, compute_dtype=jnp.float32)
    y = jax.block_until_ready(y)
    assert y.shape == (2, out_planes, 8, 8), y.shape

    # cross-check against a pure-JAX (XLA conv) reference
    x_nhwc = jnp.transpose(x, (0, 2, 3, 1)).astype(jnp.float32)
    ref = x_nhwc
    for i, p in enumerate(params):
        ref = ref_basic_block(ref, p, stride if i == 0 else 1)
    ref = jnp.transpose(ref, (0, 3, 1, 2))
    np.testing.assert_allclose(np.asarray(y), np.asarray(ref), rtol=2e-2, atol=2e-2)

    print("KERNEL_OK")
</pallas_src>

<mosaic_0001>
module attributes {stable_mosaic.version = 11 : i64} {
  func.func @_bn_relu_kernel(%arg0: i32, %arg1: memref<16x128xf32, #tpu.memory_space<vmem>>, %arg2: memref<1x128xf32, #tpu.memory_space<vmem>>, %arg3: memref<1x128xf32, #tpu.memory_space<vmem>>, %arg4: memref<16x128xf32, #tpu.memory_space<vmem>>) attributes {dimension_semantics = [#tpu.dimension_semantics<parallel>], iteration_bounds = array<i64: 1>, scalar_prefetch = 0 : i64, scratch_operands = 0 : i64, tpu.core_type = #tpu.core_type<tc>, window_params = [{transform_indices = @transform_0, window_bounds = array<i64: 16, 128>}, {pipeline_mode = #tpu.pipeline_mode<synchronous>, transform_indices = @transform_1, window_bounds = array<i64: 1, 128>}, {pipeline_mode = #tpu.pipeline_mode<synchronous>, transform_indices = @transform_2, window_bounds = array<i64: 1, 128>}, {transform_indices = @transform_3, window_bounds = array<i64: 16, 128>}]} {
    %c0 = arith.constant 0 : index
    %c0_0 = arith.constant 0 : index
    %0 = vector.load %arg1[%c0, %c0_0] : memref<16x128xf32, #tpu.memory_space<vmem>>, vector<16x128xf32>
    %c0_1 = arith.constant 0 : index
    %c0_2 = arith.constant 0 : index
    %1 = vector.load %arg2[%c0_1, %c0_2] : memref<1x128xf32, #tpu.memory_space<vmem>>, vector<1x128xf32>
    %2 = vector.broadcast %1 : vector<1x128xf32> to vector<16x128xf32>
    %3 = arith.mulf %0, %2 : vector<16x128xf32>
    %c0_3 = arith.constant 0 : index
    %c0_4 = arith.constant 0 : index
    %4 = vector.load %arg3[%c0_3, %c0_4] : memref<1x128xf32, #tpu.memory_space<vmem>>, vector<1x128xf32>
    %5 = vector.broadcast %4 : vector<1x128xf32> to vector<16x128xf32>
    %6 = arith.addf %3, %5 : vector<16x128xf32>
    %cst = arith.constant 0.000000e+00 : f32
    %7 = vector.broadcast %cst : f32 to vector<16x128xf32>
    %8 = arith.maximumf %6, %7 : vector<16x128xf32>
    %c0_5 = arith.constant 0 : index
    %c0_6 = arith.constant 0 : index
    %9 = vector.load %arg4[%c0_5, %c0_6] : memref<16x128xf32, #tpu.memory_space<vmem>>, vector<16x128xf32>
    tpu.vector_store %arg4[%c0_5, %c0_6], %8 {strides = array<i32>} : memref<16x128xf32, #tpu.memory_space<vmem>>, vector<16x128xf32>,
    return
  }
  func.func @transform_0(%arg0: i32) -> (i32, i32) {
    %c0_i32 = arith.constant 0 : i32
    %c0_i32_0 = arith.constant 0 : i32
    return %arg0, %c0_i32 : i32, i32
  }
  func.func @transform_1(%arg0: i32) -> (i32, i32) {
    %c0_i32 = arith.constant 0 : i32
    %c0_i32_0 = arith.constant 0 : i32
    %c0_i32_1 = arith.constant 0 : i32
    return %c0_i32, %c0_i32_0 : i32, i32
  }
  func.func @transform_2(%arg0: i32) -> (i32, i32) {
    %c0_i32 = arith.constant 0 : i32
    %c0_i32_0 = arith.constant 0 : i32
    %c0_i32_1 = arith.constant 0 : i32
    return %c0_i32, %c0_i32_0 : i32, i32
  }
  func.func @transform_3(%arg0: i32) -> (i32, i32) {
    %c0_i32 = arith.constant 0 : i32
    %c0_i32_0 = arith.constant 0 : i32
    return %arg0, %c0_i32 : i32, i32
  }
}

</mosaic_0001>

<llo_original>
// kernel: tpu_custom_call.1
$region0: #{tpu_custom_call.1}
  #allocation0 [shape = 'u32[]', space=smem, size = 0x4, offset = 0x4, fixed_abs, tag = 'smem constant byte address 0x4 - core index']
  #allocation1 [shape = 'u32[144,128]{1,0:T(1,128)}', space=vmem, size = 0x12000, scoped, tag = 'internal scratch']
  %s0 = inlined_call_operand.hbm [shape: f32[16,128], index: 0, kind: input, shape index: {}]
  %s1 = inlined_call_operand.vmem [shape: f32[1,128], index: 1, kind: input, shape index: {}]
  %s2 = inlined_call_operand.vmem [shape: f32[1,128], index: 2, kind: input, shape index: {}]
  %s3 = inlined_call_operand.hbm [shape: f32[16,128], index: 3, kind: output, shape index: {}]
  %s4 = sld [smem:[#allocation0]]
  $region26: #{tpu_custom_call.1} parent=0
    _
  %s6 = ssub.s32 1, %s4
  %s7 = scalar_select 0, %s6, %s4
  $region1: #{tpu_custom_call.1} parent=0
    #allocation2 [shape = 'u8[8192]{0}', space=vmem, size = 0x2000, scoped, tag = 'input window, operand 0, single buffered']
    #allocation3 [shape = 's32[1]{0}', space=sflag, size = 0x4, scoped, tag = 'scoped memory for tpu_custom_call.1']
    #allocation4 [shape = 's32[1]{0}', space=sflag, size = 0x4, scoped, tag = 'scoped memory for tpu_custom_call.1']
    #allocation5 [shape = 'u8[8192]{0}', space=vmem, size = 0x2000, scoped, tag = 'output window, operand 0, single buffered']
    %8 = vsyncpa [#allocation3], 0
    %9 = vsyncpa [#allocation4], 0
    // Predicated region
    $region2: #{tpu_custom_call.1} parent=1 // pred_check
      _
    $region3: #{tpu_custom_call.1} parent=1 // pred_check_branch
      %11 = sbr.rel (0) target = $region5
    $region4: #{tpu_custom_call.1} parent=1 // pred_region
      %s13 = ssub.s32 256, 256
      %14 = vsyncadd [#allocation3], %s13
      %s15 = sshll.u32 [#allocation2], 4
      %s16 = int_to_ptr.vmem [resolvable:$true] %s15
      %21 = dma.hbm_to_vmem [thread:$0]  %s0, 256, %s16, [#allocation3], 128, 128, 8
    $region5: #{tpu_custom_call.1} parent=1 // pred_fallthru
      _
    // Predicated region
    $region6: #{tpu_custom_call.1} parent=1 // pred_check
      _
    $region7: #{tpu_custom_call.1} parent=1 // pred_check_branch
      %23 = sbr.rel (0) target = $region9
    $region8: #{tpu_custom_call.1} parent=1 // pred_region
      _
    $region9: #{tpu_custom_call.1} parent=1 // pred_fallthru
      _
    // Predicated region
    $region10: #{tpu_custom_call.1} parent=1 // pred_check
      _
    $region11: #{tpu_custom_call.1} parent=1 // pred_check_branch
      %25 = sbr.rel (0) target = $region13
    $region12: #{tpu_custom_call.1} parent=1 // pred_region
      _
    $region13: #{tpu_custom_call.1} parent=1 // pred_fallthru
      _
    // Predicated region
    $region14: #{tpu_custom_call.1} parent=1 // pred_check
      _
    $region15: #{tpu_custom_call.1} parent=1 // pred_check_branch
      %27 = sbr.rel (0) target = $region17
    $region16: #{tpu_custom_call.1} parent=1 // pred_region
      %28 = dma.done [#allocation3], 256
    $region17: #{tpu_custom_call.1} parent=1 // pred_fallthru
      _
    %v29 = vld [vmem:[#allocation2] sm:$0xff]
    %v30 = vld [vmem:[#allocation2 + $0x8] sm:$0xff]
    %v31 = vld [vmem:[%s1] sm:$0x1]
    %v33 = vlaneseq
    %v34 = vshrl.u32 %v33, 7
    %v35 = vsub.s32 0, %v34
    %v36 = vrot.slane %v31, %v35
    %v38 = vmul.f32 %v29, %v36
    %v39 = vmul.f32 %v30, %v36
    %v40 = vld [vmem:[%s2] sm:$0x1]
    %v42 = vlaneseq
    %v43 = vshrl.u32 %v42, 7
    %v44 = vsub.s32 0, %v43
    %v45 = vrot.slane %v40, %v44
    %v47 = vadd.f32 %v38, %v45
    %v48 = vadd.f32 %v39, %v45
    %v49 = vmax.f32 %v47, 0.0
    %v50 = vmax.f32 %v48, 0.0
    %51 = vst [vmem:[#allocation5] sm:$0xff] %v49
    %52 = vst [vmem:[#allocation5 + $0x8] sm:$0xff] %v50
    // Predicated region
    $region18: #{tpu_custom_call.1} parent=1 // pred_check
      _
    $region19: #{tpu_custom_call.1} parent=1 // pred_check_branch
      %54 = sbr.rel (0) target = $region21
    $region20: #{tpu_custom_call.1} parent=1 // pred_region
      %s56 = ssub.s32 256, 256
      %57 = vsyncadd [#allocation4], %s56
      %s58 = sshll.u32 [#allocation5], 4
      %s59 = int_to_ptr.vmem [resolvable:$true] %s58
      %64 = dma.vmem_to_hbm [thread:$0]  %s59, 256, %s3, [#allocation4], 128, 128, 8
    $region21: #{tpu_custom_call.1} parent=1 // pred_fallthru
      _
    // Predicated region
    $region22: #{tpu_custom_call.1} parent=1 // pred_check
      _
    $region23: #{tpu_custom_call.1} parent=1 // pred_check_branch
      %66 = sbr.rel (0) target = $region25
    $region24: #{tpu_custom_call.1} parent=1 // pred_region
      %67 = dma.done [#allocation4], 256
    $region25: #{tpu_custom_call.1} parent=1 // pred_fallthru
      _
    %68 = vsyncpa [#allocation3], 1
    %69 = vsyncpa [#allocation4], 1

</llo_original>
